<compile_context>
chip_gen: v6e
topology: v6e:2x2x1
jax: 0.10.0
libtpu: 0.0.40
codegen_flags: <defaults>
</compile_context>

<pallas_src>
import functools

import jax
import jax.numpy as jnp
from jax import lax
from jax.experimental import pallas as pl
from jax.experimental.pallas import tpu as pltpu


def _round_up(x, m):
    return ((x + m - 1) // m) * m


def _cheb_kernel(theta_ref, a_ref, xpf_ref, xpb_ref, bias_ref, out_ref,
                 tf_ref, tb_ref, *, k, tm):
    """One grid step = (order phase p, row block r); phase p computes order p+1.

    theta_ref : SMEM (k+1,)        f32   Chebyshev coefficients
    a_ref     : VMEM (tm, Np)      bf16  row block of Â = -D^{-1/2} A D^{-1/2}
    xpf_ref   : VMEM (tm, Fp)      f32   x_proj rows (only fetched in phase 0)
    xpb_ref   : VMEM (Np, Fp)      bf16  full x_proj (T_0), MXU RHS for order 1
    bias_ref  : VMEM (1, Fp)       f32   0.5*sum(theta[1:]) * colsum(Wᵀ)
    out_ref   : VMEM (Np, Fp)      f32   resident accumulator / final output
    tf_ref    : VMEM (2, Np, Fp)   f32   Chebyshev state ping/pong (recursion)
    tb_ref    : VMEM (2, Np, Fp)   bf16  bf16 mirror of the state (MXU RHS cache)
    """
    p = pl.program_id(0)                       # phase 0..k-1  -> order p+1
    r = pl.program_id(1)                       # row block
    order = p + 1
    row0 = pl.multiple_of(r * tm, tm)
    rows = pl.ds(row0, tm)

    cur = lax.rem(order, 2)                    # slab that receives T_order
    prv = 1 - cur                              # slab holding T_{order-1}
    coef = 0.5 * theta_ref[order]              # folds the (T+1)/2 half

    tf_cur = tf_ref.at[cur]
    tf_prv = tf_ref.at[prv]
    tb_cur = tb_ref.at[cur]

    # ---- phase 0 (order 1): T_1 = Â x_proj; seed state; init accumulator ----
    @pl.when(p == 0)
    def _():
        xp = xpf_ref[...]                                          # (tm, Fp) f32
        m = jnp.dot(a_ref[...], xpb_ref[...],
                    preferred_element_type=jnp.float32)            # T_1 rows
        tf_prv[rows, :] = xp                                       # T_0 (f32)
        tf_cur[rows, :] = m                                        # T_1 (f32)
        tb_cur[rows, :] = m.astype(tb_ref.dtype)                   # T_1 (bf16 RHS)
        out_ref[rows, :] = theta_ref[0] * xp + bias_ref[...] + coef * m

    # ---- phases 1..k-1 (orders 2..k): T_o = 2·Â T_{o-1} − T_{o-2} ----
    @pl.when(p >= 1)
    def _():
        m = jnp.dot(a_ref[...], tb_ref[prv],                       # bf16 RHS cache
                    preferred_element_type=jnp.float32)
        t_new = 2.0 * m - tf_cur[rows, :]          # tf[cur] still holds T_{o-2}
        tf_cur[rows, :] = t_new
        tb_cur[rows, :] = t_new.astype(tb_ref.dtype)
        out_ref[rows, :] = out_ref[rows, :] + coef * t_new

    # ---- last phase: leaky_relu(0.01) epilogue in place ----
    @pl.when(p == k - 1)
    def _():
        y = out_ref[rows, :]
        out_ref[rows, :] = jnp.where(y > 0, y, 0.01 * y)


def prepare_cheb_graph(adj, *, row_tile=512):
    """One-time, cacheable graph preprocessing (reuse across layers / steps).

    adj: (N, N) dense adjacency with A[dst, src].  Returns the padded bf16
    pre-scaled operator Â = -D^{-1/2} A D^{-1/2} plus tiling metadata.
    """
    adj = adj.astype(jnp.float32)
    n = adj.shape[0]
    # in_degrees().clamp(min=1) ** -0.5   (A[dst, src] -> in-degree = row sum)
    deg = jnp.maximum(jnp.sum(adj, axis=1), 1.0)
    d = deg ** -0.5
    a_hat = -(d[:, None] * adj) * d[None, :]            # minus sign folded in

    tm = min(row_tile, _round_up(n, 8))
    np_ = _round_up(n, tm)
    a_p = jnp.zeros((np_, np_), jnp.bfloat16).at[:n, :n].set(
        a_hat.astype(jnp.bfloat16))
    return {"a_hat": a_p, "n": n, "np": np_, "tm": tm}


def _vmem_budget_bytes(np_, tm, fout_p):
    """Derived VMEM need: resident out + f32/bf16 T state + (double-buffered) inputs."""
    out_b = np_ * fout_p * 4                  # resident accumulator
    tf_b = 2 * np_ * fout_p * 4               # f32 T ping/pong
    tb_b = 2 * np_ * fout_p * 2               # bf16 T mirror ping/pong
    a_b = 2 * tm * np_ * 2                    # double-buffered Â row blocks
    xpb_b = 2 * np_ * fout_p * 2              # bf16 x_proj (constant index map)
    xpf_b = 2 * tm * fout_p * 4               # f32 x_proj row blocks
    bias_b = 2 * fout_p * 4
    return out_b + tf_b + tb_b + a_b + xpb_b + xpf_b + bias_b


def domain_adjusted_cheb_conv(graph, feat, theta, weight, k):
    """graph: prepare_cheb_graph(...) dict, or a raw (N,N) adjacency A[dst,src].
    feat: (N, Fin).  theta: (k+1,).  weight: (Fout, Fin)."""
    if not isinstance(graph, dict):
        graph = prepare_cheb_graph(graph)
    a_p, n, np_, tm = graph["a_hat"], graph["n"], graph["np"], graph["tm"]
    n_blocks = np_ // tm

    fout = weight.shape[0]
    fout_p = _round_up(fout, 128)

    theta32 = theta.astype(jnp.float32)
    w32 = weight.astype(jnp.float32)

    # Projection hoisted out of the kernel (commutes with the linear recursion).
    xproj = feat.astype(jnp.float32) @ w32.T                       # (n, fout)
    xproj_f32 = jnp.zeros((np_, fout_p), jnp.float32).at[:n, :fout].set(xproj)
    xproj_b16 = xproj_f32.astype(jnp.bfloat16)

    if k == 0:   # no graph propagation: h = theta0 * feat, then linear + act
        y = theta32[0] * xproj_f32
        y = jnp.where(y > 0, y, 0.01 * y)
        return y[:n, :fout]

    # "+1" of (T_k+1)/2 through the linear layer: ones(N,Fin) @ Wᵀ = colsum(Wᵀ).
    bias_row = jnp.zeros((1, fout_p), jnp.float32).at[0, :fout].set(
        0.5 * jnp.sum(theta32[1:]) * jnp.sum(w32, axis=1))

    # VMEM budget derived from the actual shapes (v7x has only 64 MiB physical).
    try:
        phys = pltpu.get_tpu_info().vmem_capacity_bytes
    except Exception:
        phys = 64 * 1024 * 1024               # conservative (v7x) fallback
    need = _vmem_budget_bytes(np_, tm, fout_p)
    cap = min(int(phys * 0.8), 100 * 1024 * 1024)
    vmem_limit = int(min(max(need + (8 << 20), 32 << 20), cap))

    kernel = functools.partial(_cheb_kernel, k=k, tm=tm)
    out = pl.pallas_call(
        kernel,
        out_shape=jax.ShapeDtypeStruct((np_, fout_p), jnp.float32),
        grid=(k, n_blocks),
        in_specs=[
            pl.BlockSpec(memory_space=pltpu.MemorySpace.SMEM),            # theta
            pl.BlockSpec((tm, np_), lambda p, r: (r, 0)),                 # Â row block (bf16)
            # x_proj f32 rows: only needed in phase 0; collapse to block 0
            # afterwards so no dead DMA is issued for later phases.
            pl.BlockSpec((tm, fout_p),
                         lambda p, r: (jnp.where(p == 0, r, 0), 0)),
            pl.BlockSpec((np_, fout_p), lambda p, r: (0, 0)),             # x_proj bf16 (resident)
            pl.BlockSpec((1, fout_p), lambda p, r: (0, 0)),               # bias row
        ],
        out_specs=pl.BlockSpec((np_, fout_p), lambda p, r: (0, 0)),       # resident acc
        scratch_shapes=[pltpu.VMEM((2, np_, fout_p), jnp.float32),        # f32 T state
                        pltpu.VMEM((2, np_, fout_p), jnp.bfloat16)],      # bf16 RHS cache
        compiler_params=pltpu.CompilerParams(
            dimension_semantics=("arbitrary", "arbitrary"),
            vmem_limit_bytes=vmem_limit),
    )(theta32, a_p, xproj_f32, xproj_b16, bias_row)
    return out[:n, :fout]


def _reference(adj, feat, theta, weight, k):
    """Pure-JAX f32 mirror of the PyTorch forward (recomputes basis per order)."""
    deg = jnp.maximum(jnp.sum(adj, axis=1), 1.0)
    d = (deg ** -0.5)[:, None]

    def l_prime(x):
        return -(adj @ (x * d)) * d

    def cheb_basis(x, order):
        if order == 0:
            return x
        if order == 1:
            return l_prime(x)
        t_km1, t_km2 = l_prime(x), x
        for _ in range(2, order + 1):
            t_k = 2.0 * l_prime(t_km1) - t_km2
            t_km2, t_km1 = t_km1, t_k
        return t_km1

    h = theta[0] * feat
    for order in range(1, k + 1):
        t_k = cheb_basis(feat, order)
        h = h + theta[order] * (t_k + 1.0) / 2.0
    y = h @ weight.T
    return jnp.where(y > 0, y, 0.01 * y)


if __name__ == "__main__":
    N, IN_FEATS, OUT_FEATS, K = 16, 8, 32, 3

    key = jax.random.PRNGKey(0)
    k_adj, k_feat, k_theta, k_w = jax.random.split(key, 4)

    # Deterministic synthetic graph: random adjacency with self loops.
    adj = (jax.random.uniform(k_adj, (N, N)) < 0.3).astype(jnp.float32)
    adj = jnp.maximum(adj, jnp.eye(N, dtype=jnp.float32))

    feat = jax.random.normal(k_feat, (N, IN_FEATS), dtype=jnp.float32)

    # theta ~ Normal(0, 0.1);  linear weight: xavier_uniform, shape (out, in)
    theta = 0.1 * jax.random.normal(k_theta, (K + 1,), dtype=jnp.float32)
    limit = (6.0 / (IN_FEATS + OUT_FEATS)) ** 0.5
    weight = jax.random.uniform(k_w, (OUT_FEATS, IN_FEATS), dtype=jnp.float32,
                                minval=-limit, maxval=limit)

    graph = prepare_cheb_graph(adj)              # cacheable across layers/steps
    out = domain_adjusted_cheb_conv(graph, feat, theta, weight, K)
    out = jax.block_until_ready(out)

    ref = _reference(adj, feat, theta, weight, K)
    assert out.shape == (N, OUT_FEATS)
    # bf16 Â and bf16 Chebyshev RHS cache: tolerance loosened vs the f32 reference.
    err = jnp.max(jnp.abs(out - ref))
    assert jnp.allclose(out, ref, atol=3e-2, rtol=3e-2), f"max abs err {err}"

    print("KERNEL_OK")
</pallas_src>

<mosaic_0001>
module attributes {stable_mosaic.version = 11 : i64} {
  func.func @_cheb_kernel(%arg0: i32, %arg1: i32, %arg2: memref<4xf32, #tpu.memory_space<smem>>, %arg3: memref<16x16xbf16, #tpu.memory_space<vmem>>, %arg4: memref<16x128xf32, #tpu.memory_space<vmem>>, %arg5: memref<16x128xbf16, #tpu.memory_space<vmem>>, %arg6: memref<1x128xf32, #tpu.memory_space<vmem>>, %arg7: memref<16x128xf32, #tpu.memory_space<vmem>>, %arg8: memref<2x16x128xf32, #tpu.memory_space<vmem>>, %arg9: memref<2x16x128xbf16, #tpu.memory_space<vmem>>) attributes {dimension_semantics = [#tpu.dimension_semantics<arbitrary>, #tpu.dimension_semantics<arbitrary>], iteration_bounds = array<i64: 3, 1>, scalar_prefetch = 0 : i64, scratch_operands = 2 : i64, tpu.core_type = #tpu.core_type<tc>, window_params = [{transform_indices = @transform_0, window_bounds = array<i64: 4>}, {transform_indices = @transform_1, window_bounds = array<i64: 16, 16>}, {transform_indices = @transform_2, window_bounds = array<i64: 16, 128>}, {pipeline_mode = #tpu.pipeline_mode<synchronous>, transform_indices = @transform_3, window_bounds = array<i64: 16, 128>}, {pipeline_mode = #tpu.pipeline_mode<synchronous>, transform_indices = @transform_4, window_bounds = array<i64: 1, 128>}, {pipeline_mode = #tpu.pipeline_mode<synchronous>, transform_indices = @transform_5, window_bounds = array<i64: 16, 128>}]} {
    %c1_i32 = arith.constant 1 : i32
    %0 = arith.addi %arg0, %c1_i32 : i32
    %c16_i32 = arith.constant 16 : i32
    %1 = arith.muli %arg1, %c16_i32 : i32
    %2 = tpu.assume_multiple %1, 16 : i32
    %c2_i32 = arith.constant 2 : i32
    %3 = arith.remsi %0, %c2_i32 : i32
    %c1_i32_0 = arith.constant 1 : i32
    %4 = arith.subi %c1_i32_0, %3 : i32
    %5 = arith.index_cast %0 : i32 to index
    %6 = memref.load %arg2[%5] : memref<4xf32, #tpu.memory_space<smem>>
    %cst = arith.constant 5.000000e-01 : f32
    %7 = arith.mulf %cst, %6 : f32
    %c0_i32 = arith.constant 0 : i32
    %8 = arith.cmpi eq, %arg0, %c0_i32 : i32
    %9 = arith.extui %8 : i1 to i32
    %c0_i32_1 = arith.constant 0 : i32
    %10 = arith.cmpi ne, %9, %c0_i32_1 : i32
    scf.if %10 {
      %c0 = arith.constant 0 : index
      %c0_6 = arith.constant 0 : index
      %17 = vector.load %arg4[%c0, %c0_6] : memref<16x128xf32, #tpu.memory_space<vmem>>, vector<16x128xf32>
      %c0_7 = arith.constant 0 : index
      %c0_8 = arith.constant 0 : index
      %18 = vector.load %arg3[%c0_7, %c0_8] : memref<16x16xbf16, #tpu.memory_space<vmem>>, vector<16x16xbf16>
      %c0_9 = arith.constant 0 : index
      %c0_10 = arith.constant 0 : index
      %19 = vector.load %arg5[%c0_9, %c0_10] : memref<16x128xbf16, #tpu.memory_space<vmem>>, vector<16x128xbf16>
      %cst_11 = arith.constant dense<0.000000e+00> : vector<16x128xf32>
      %20 = tpu.matmul %18, %19, %cst_11 {dimension_numbers = #tpu.dot_dimension_numbers<[1], [0], [0], [1], [0, 0, 1, 1], [], []>} : vector<16x16xbf16>, vector<16x128xbf16>, vector<16x128xf32> -> vector<16x128xf32>
      %c0_i32_12 = arith.constant 0 : i32
      %c0_i32_13 = arith.constant 0 : i32
      %21 = tpu.memref_slice %arg8[%4, %c0_i32_12, %c0_i32_13] : memref<2x16x128xf32, #tpu.memory_space<vmem>> -> memref<1x16x128xf32, #tpu.memory_space<vmem>>
      %22 = tpu.memref_squeeze %21 : memref<1x16x128xf32, #tpu.memory_space<vmem>> -> memref<16x128xf32, #tpu.memory_space<vmem>>
      %23 = arith.index_cast %2 : i32 to index
      %c0_14 = arith.constant 0 : index
      %24 = vector.load %22[%23, %c0_14] : memref<16x128xf32, #tpu.memory_space<vmem>>, vector<16x128xf32>
      tpu.vector_store %22[%23, %c0_14], %17 {strides = array<i32>} : memref<16x128xf32, #tpu.memory_space<vmem>>, vector<16x128xf32>,
      %c0_i32_15 = arith.constant 0 : i32
      %c0_i32_16 = arith.constant 0 : i32
      %25 = tpu.memref_slice %arg8[%3, %c0_i32_15, %c0_i32_16] : memref<2x16x128xf32, #tpu.memory_space<vmem>> -> memref<1x16x128xf32, #tpu.memory_space<vmem>>
      %26 = tpu.memref_squeeze %25 : memref<1x16x128xf32, #tpu.memory_space<vmem>> -> memref<16x128xf32, #tpu.memory_space<vmem>>
      %27 = arith.index_cast %2 : i32 to index
      %c0_17 = arith.constant 0 : index
      %28 = vector.load %26[%27, %c0_17] : memref<16x128xf32, #tpu.memory_space<vmem>>, vector<16x128xf32>
      tpu.vector_store %26[%27, %c0_17], %20 {strides = array<i32>} : memref<16x128xf32, #tpu.memory_space<vmem>>, vector<16x128xf32>,
      %29 = arith.truncf %20 : vector<16x128xf32> to vector<16x128xbf16>
      %c0_i32_18 = arith.constant 0 : i32
      %c0_i32_19 = arith.constant 0 : i32
      %30 = tpu.memref_slice %arg9[%3, %c0_i32_18, %c0_i32_19] : memref<2x16x128xbf16, #tpu.memory_space<vmem>> -> memref<1x16x128xbf16, #tpu.memory_space<vmem>>
      %31 = tpu.memref_squeeze %30 : memref<1x16x128xbf16, #tpu.memory_space<vmem>> -> memref<16x128xbf16, #tpu.memory_space<vmem>>
      %32 = arith.index_cast %2 : i32 to index
      %c0_20 = arith.constant 0 : index
      %33 = vector.load %31[%32, %c0_20] : memref<16x128xbf16, #tpu.memory_space<vmem>>, vector<16x128xbf16>
      tpu.vector_store %31[%32, %c0_20], %29 {strides = array<i32>} : memref<16x128xbf16, #tpu.memory_space<vmem>>, vector<16x128xbf16>,
      %c0_21 = arith.constant 0 : index
      %34 = memref.load %arg2[%c0_21] : memref<4xf32, #tpu.memory_space<smem>>
      %35 = vector.broadcast %34 : f32 to vector<16x128xf32>
      %36 = arith.mulf %35, %17 : vector<16x128xf32>
      %c0_22 = arith.constant 0 : index
      %c0_23 = arith.constant 0 : index
      %37 = vector.load %arg6[%c0_22, %c0_23] : memref<1x128xf32, #tpu.memory_space<vmem>>, vector<1x128xf32>
      %38 = vector.broadcast %37 : vector<1x128xf32> to vector<16x128xf32>
      %39 = arith.addf %36, %38 : vector<16x128xf32>
      %40 = vector.broadcast %7 : f32 to vector<16x128xf32>
      %41 = arith.mulf %40, %20 : vector<16x128xf32>
      %42 = arith.addf %39, %41 : vector<16x128xf32>
      %43 = arith.index_cast %2 : i32 to index
      %c0_24 = arith.constant 0 : index
      %44 = vector.load %arg7[%43, %c0_24] : memref<16x128xf32, #tpu.memory_space<vmem>>, vector<16x128xf32>
      tpu.vector_store %arg7[%43, %c0_24], %42 {strides = array<i32>} : memref<16x128xf32, #tpu.memory_space<vmem>>, vector<16x128xf32>,
    } else {
    }
    %c1_i32_2 = arith.constant 1 : i32
    %11 = arith.cmpi sge, %arg0, %c1_i32_2 : i32
    %12 = arith.extui %11 : i1 to i32
    %c0_i32_3 = arith.constant 0 : i32
    %13 = arith.cmpi ne, %12, %c0_i32_3 : i32
    scf.if %13 {
      %c0 = arith.constant 0 : index
      %c0_6 = arith.constant 0 : index
      %17 = vector.load %arg3[%c0, %c0_6] : memref<16x16xbf16, #tpu.memory_space<vmem>>, vector<16x16xbf16>
      %18 = arith.index_cast %4 : i32 to index
      %c0_7 = arith.constant 0 : index
      %c0_8 = arith.constant 0 : index
      %19 = vector.load %arg9[%18, %c0_7, %c0_8] : memref<2x16x128xbf16, #tpu.memory_space<vmem>>, vector<1x16x128xbf16>
      %20 = vector.shape_cast %19 : vector<1x16x128xbf16> to vector<16x128xbf16>
      %cst_9 = arith.constant dense<0.000000e+00> : vector<16x128xf32>
      %21 = tpu.matmul %17, %20, %cst_9 {dimension_numbers = #tpu.dot_dimension_numbers<[1], [0], [0], [1], [0, 0, 1, 1], [], []>} : vector<16x16xbf16>, vector<16x128xbf16>, vector<16x128xf32> -> vector<16x128xf32>
      %cst_10 = arith.constant 2.000000e+00 : f32
      %22 = vector.broadcast %cst_10 : f32 to vector<16x128xf32>
      %23 = arith.mulf %22, %21 : vector<16x128xf32>
      %c0_i32_11 = arith.constant 0 : i32
      %c0_i32_12 = arith.constant 0 : i32
      %24 = tpu.memref_slice %arg8[%3, %c0_i32_11, %c0_i32_12] : memref<2x16x128xf32, #tpu.memory_space<vmem>> -> memref<1x16x128xf32, #tpu.memory_space<vmem>>
      %25 = tpu.memref_squeeze %24 : memref<1x16x128xf32, #tpu.memory_space<vmem>> -> memref<16x128xf32, #tpu.memory_space<vmem>>
      %26 = arith.index_cast %2 : i32 to index
      %c0_13 = arith.constant 0 : index
      %27 = vector.load %25[%26, %c0_13] : memref<16x128xf32, #tpu.memory_space<vmem>>, vector<16x128xf32>
      %28 = arith.subf %23, %27 : vector<16x128xf32>
      %c0_i32_14 = arith.constant 0 : i32
      %c0_i32_15 = arith.constant 0 : i32
      %29 = tpu.memref_slice %arg8[%3, %c0_i32_14, %c0_i32_15] : memref<2x16x128xf32, #tpu.memory_space<vmem>> -> memref<1x16x128xf32, #tpu.memory_space<vmem>>
      %30 = tpu.memref_squeeze %29 : memref<1x16x128xf32, #tpu.memory_space<vmem>> -> memref<16x128xf32, #tpu.memory_space<vmem>>
      %31 = arith.index_cast %2 : i32 to index
      %c0_16 = arith.constant 0 : index
      %32 = vector.load %30[%31, %c0_16] : memref<16x128xf32, #tpu.memory_space<vmem>>, vector<16x128xf32>
      tpu.vector_store %30[%31, %c0_16], %28 {strides = array<i32>} : memref<16x128xf32, #tpu.memory_space<vmem>>, vector<16x128xf32>,
      %33 = arith.truncf %28 : vector<16x128xf32> to vector<16x128xbf16>
      %c0_i32_17 = arith.constant 0 : i32
      %c0_i32_18 = arith.constant 0 : i32
      %34 = tpu.memref_slice %arg9[%3, %c0_i32_17, %c0_i32_18] : memref<2x16x128xbf16, #tpu.memory_space<vmem>> -> memref<1x16x128xbf16, #tpu.memory_space<vmem>>
      %35 = tpu.memref_squeeze %34 : memref<1x16x128xbf16, #tpu.memory_space<vmem>> -> memref<16x128xbf16, #tpu.memory_space<vmem>>
      %36 = arith.index_cast %2 : i32 to index
      %c0_19 = arith.constant 0 : index
      %37 = vector.load %35[%36, %c0_19] : memref<16x128xbf16, #tpu.memory_space<vmem>>, vector<16x128xbf16>
      tpu.vector_store %35[%36, %c0_19], %33 {strides = array<i32>} : memref<16x128xbf16, #tpu.memory_space<vmem>>, vector<16x128xbf16>,
      %38 = arith.index_cast %2 : i32 to index
      %c0_20 = arith.constant 0 : index
      %39 = vector.load %arg7[%38, %c0_20] : memref<16x128xf32, #tpu.memory_space<vmem>>, vector<16x128xf32>
      %40 = vector.broadcast %7 : f32 to vector<16x128xf32>
      %41 = arith.mulf %40, %28 : vector<16x128xf32>
      %42 = arith.addf %39, %41 : vector<16x128xf32>
      %43 = arith.index_cast %2 : i32 to index
      %c0_21 = arith.constant 0 : index
      %44 = vector.load %arg7[%43, %c0_21] : memref<16x128xf32, #tpu.memory_space<vmem>>, vector<16x128xf32>
      tpu.vector_store %arg7[%43, %c0_21], %42 {strides = array<i32>} : memref<16x128xf32, #tpu.memory_space<vmem>>, vector<16x128xf32>,
    } else {
    }
    %c2_i32_4 = arith.constant 2 : i32
    %14 = arith.cmpi eq, %arg0, %c2_i32_4 : i32
    %15 = arith.extui %14 : i1 to i32
    %c0_i32_5 = arith.constant 0 : i32
    %16 = arith.cmpi ne, %15, %c0_i32_5 : i32
    scf.if %16 {
      %17 = arith.index_cast %2 : i32 to index
      %c0 = arith.constant 0 : index
      %18 = vector.load %arg7[%17, %c0] : memref<16x128xf32, #tpu.memory_space<vmem>>, vector<16x128xf32>
      %cst_6 = arith.constant 0.000000e+00 : f32
      %19 = vector.broadcast %cst_6 : f32 to vector<16x128xf32>
      %20 = arith.cmpf ogt, %18, %19 : vector<16x128xf32>
      %cst_7 = arith.constant 0.00999999977 : f32
      %21 = vector.broadcast %cst_7 : f32 to vector<16x128xf32>
      %22 = arith.mulf %21, %18 : vector<16x128xf32>
      %23 = arith.select %20, %18, %22 : vector<16x128xi1>, vector<16x128xf32>
      %24 = arith.index_cast %2 : i32 to index
      %c0_8 = arith.constant 0 : index
      %25 = vector.load %arg7[%24, %c0_8] : memref<16x128xf32, #tpu.memory_space<vmem>>, vector<16x128xf32>
      tpu.vector_store %arg7[%24, %c0_8], %23 {strides = array<i32>} : memref<16x128xf32, #tpu.memory_space<vmem>>, vector<16x128xf32>,
    } else {
    }
    return
  }
  func.func @transform_0(%arg0: i32, %arg1: i32) -> i32 {
    %c0_i32 = arith.constant 0 : i32
    %c0_i32_0 = arith.constant 0 : i32
    return %c0_i32 : i32
  }
  func.func @transform_1(%arg0: i32, %arg1: i32) -> (i32, i32) {
    %c0_i32 = arith.constant 0 : i32
    %c0_i32_0 = arith.constant 0 : i32
    return %arg1, %c0_i32 : i32, i32
  }
  func.func @transform_2(%arg0: i32, %arg1: i32) -> (i32, i32) {
    %c0_i32 = arith.constant 0 : i32
    %0 = arith.cmpi eq, %arg0, %c0_i32 : i32
    %c0_i32_0 = arith.constant 0 : i32
    %1 = arith.select %0, %arg1, %c0_i32_0 : i32
    %c0_i32_1 = arith.constant 0 : i32
    %c0_i32_2 = arith.constant 0 : i32
    return %1, %c0_i32_1 : i32, i32
  }
  func.func @transform_3(%arg0: i32, %arg1: i32) -> (i32, i32) {
    %c0_i32 = arith.constant 0 : i32
    %c0_i32_0 = arith.constant 0 : i32
    %c0_i32_1 = arith.constant 0 : i32
    return %c0_i32, %c0_i32_0 : i32, i32
  }
  func.func @transform_4(%arg0: i32, %arg1: i32) -> (i32, i32) {
    %c0_i32 = arith.constant 0 : i32
    %c0_i32_0 = arith.constant 0 : i32
    %c0_i32_1 = arith.constant 0 : i32
    return %c0_i32, %c0_i32_0 : i32, i32
  }
  func.func @transform_5(%arg0: i32, %arg1: i32) -> (i32, i32) {
    %c0_i32 = arith.constant 0 : i32
    %c0_i32_0 = arith.constant 0 : i32
    %c0_i32_1 = arith.constant 0 : i32
    return %c0_i32, %c0_i32_0 : i32, i32
  }
}

</mosaic_0001>

<llo_original>
// kernel: tpu_custom_call.1
$region0: #{tpu_custom_call.1}
  #allocation0 [shape = 'u32[]', space=smem, size = 0x4, offset = 0x4, fixed_abs, tag = 'smem constant byte address 0x4 - core index']
  #allocation1 [shape = 'u32[144,128]{1,0:T(1,128)}', space=vmem, size = 0x12000, scoped, tag = 'internal scratch']
  #allocation2 [shape = 'f32[2,16,128]{2,1,0:T(8,128)}', space=vmem, size = 0x4000, scoped, tag = 'scratch operand']
  #allocation3 [shape = 'bf16[2,16,128]{2,1,0:T(8,128)(2,1)}', space=vmem, size = 0x2000, scoped, tag = 'scratch operand']
  %s0 = inlined_call_operand.hbm [shape: f32[4], index: 0, kind: input, shape index: {}]
  %s1 = inlined_call_operand.hbm [shape: bf16[16,16], index: 1, kind: input, shape index: {}]
  %s2 = inlined_call_operand.hbm [shape: f32[16,128], index: 2, kind: input, shape index: {}]
  %s3 = inlined_call_operand.hbm [shape: bf16[16,128], index: 3, kind: input, shape index: {}]
  %s4 = inlined_call_operand.vmem [shape: f32[1,128], index: 4, kind: input, shape index: {}]
  %s5 = inlined_call_operand.hbm [shape: f32[16,128], index: 5, kind: output, shape index: {}]
  %s6 = sld [smem:[#allocation0]]
  $region81: #{tpu_custom_call.1} parent=0
    _
  %s8 = ssub.s32 1, %s6
  %s9 = scalar_select 0, %s8, %s6
  $region1: #{tpu_custom_call.1} parent=0
    #allocation4 [shape = 'u8[512]{0}', space=smem, size = 0x200, scoped, tag = 'input window, operand 0, single buffered']
    #allocation5 [shape = 's32[2]{0}', space=sflag, size = 0x8, scoped, tag = 'scoped memory for tpu_custom_call.1']
    #allocation6 [shape = 's32[2]{0}', space=sflag, size = 0x8, scoped, tag = 'scoped memory for tpu_custom_call.1']
    #allocation7 [shape = 's32[2]{0}', space=sflag, size = 0x8, scoped, tag = 'scoped memory for tpu_custom_call.1']
    #allocation8 [shape = 'u8[4096]{0}', space=vmem, size = 0x1000, scoped, tag = 'input window, operand 1, single buffered']
    #allocation9 [shape = 'u8[16384]{0}', space=vmem, size = 0x4000, scoped, tag = 'input window, operand 2']
    #allocation10 [shape = 's32[2]{0}', space=sflag, size = 0x8, scoped, tag = 'scoped memory for tpu_custom_call.1']
    #allocation11 [shape = 'u8[4096]{0}', space=vmem, size = 0x1000, scoped, tag = 'input window, operand 3, single buffered']
    #allocation12 [shape = 'u8[8192]{0}', space=vmem, size = 0x2000, scoped, tag = 'output window, operand 0, single buffered']
    %10 = vsyncpa [#allocation7], 0
    %11 = vsyncpa [#allocation5], 0
    %12 = vsyncpa [#allocation10], 0
    %s13 = scalar_lea.sflag [#allocation10], 1
    %14 = vsyncpa %s13, 0
    %15 = vsyncpa [#allocation6], 0
    loop: start=0, step=1, limit=5
    $region2: #{tpu_custom_call.1} parent=1 // loop_pre_header
      _
    $region3: #{tpu_custom_call.1} parent=1 // loop_header
      %s17 = sphi 0, %s21
      %p18 = scmp.ge.s32.totalorder %s17, 5
      %s24 = sphi 0, %s36
      %s25 = sphi 0, %s32
      %s26 = sphi 0, %s24
      %s27 = sphi 0, %s25
      %s28 = sphi 0, %s26
      %s29 = sphi 0, %s27
      %s37 = sphi 0, %s37
      %s39 = sphi 0, %s37
      %s40 = sphi 0, %s39
      %s54 = sphi 0, %s40
      %s60 = sphi 0, %s62
      %s63 = sphi 0, %s60
      %s64 = sphi 0, %s63
      %s80 = sphi 0, %s64
      %s90 = sphi 0, %s92
      %s93 = sphi 0, %s90
      %s94 = sphi 0, %s93
      %s110 = sphi 0, %s94
      %s114 = sphi 0, %s114
      %s116 = sphi 0, %s114
      %s117 = sphi 0, %s116
      %s131 = sphi 0, %s117
      %s135 = sphi 0, %s135
      %s137 = sphi 0, %s135
      %s138 = sphi 0, %s137
      %s152 = sphi 0, %s138
      %s156 = sphi 0, %s156
      %s158 = sphi 0, %s156
      %s159 = sphi 0, %s158
      %s173 = sphi 0, %s159
    $region4: #{tpu_custom_call.1} parent=1 // loop_header_branch
      %20 = sbr.rel (%p18) target = $region8
    $region5: #{tpu_custom_call.1} parent=1 // loop_body
      %s22 = ssub.s32 %s17, 1
      %s23 = ssub.s32 %s17, 2
      %s30 = sadd.s32 1, %s25
      %p31 = scmp.ge.s32.totalorder %s30, 1
      %s32 = scalar_select %p31, 0, %s30
      %s33 = sadd.s32 1, %s24
      %s34 = scalar_select %p31, %s33, %s24
      %p35 = scmp.ge.s32.totalorder %s34, 3
      %s36 = scalar_select %p35, 0, %s34
      %s38 = sadd.s32 %s37, 1
      %p41 = scmp.eq.s32.totalorder %s17, 2
      %p42 = scmp.ne.s32.totalorder %s37, %s39
      %p43 = scmp.eq.s32.totalorder %s17, 0
      %p44 = por %p42, %p43
      %p45 = scmp.ne.s32.totalorder %s37, %s39
      %p46 = scmp.eq.s32.totalorder %s22, 2
      %p47 = por %p45, %p46
      %p48 = scmp.ne.s32.totalorder %s39, %s40
      %p49 = scmp.eq.s32.totalorder %s22, 0
      %p50 = por %p48, %p49
      %p51 = scmp.ne.s32.totalorder %s39, %s40
      %p52 = scmp.eq.s32.totalorder %s23, 2
      %p53 = por %p51, %p52
      %p55 = scmp.ne.s32.totalorder %s40, %s54
      %p56 = scmp.eq.s32.totalorder %s23, 0
      %p57 = por %p55, %p56
      %s58 = ssub.s32 %s25, %s32
      %p59 = scmp.eq.s32.totalorder %s58, 0
      %s61 = sadd.s32 %s60, 1
      %s62 = scalar_select %p59, %s60, %s61
      %p65 = pneg %p59
      %p66 = scmp.eq.s32.totalorder %s17, 2
      %p67 = por %p65, %p66
      %p68 = scmp.ne.s32.totalorder %s60, %s63
      %p69 = scmp.eq.s32.totalorder %s17, 0
      %p70 = por %p68, %p69
      %p71 = scmp.ne.s32.totalorder %s60, %s63
      %p72 = scmp.eq.s32.totalorder %s22, 2
      %p73 = por %p71, %p72
      %p74 = scmp.ne.s32.totalorder %s63, %s64
      %p75 = scmp.eq.s32.totalorder %s22, 0
      %p76 = por %p74, %p75
      %p77 = scmp.ne.s32.totalorder %s63, %s64
      %p78 = scmp.eq.s32.totalorder %s23, 2
      %p79 = por %p77, %p78
      %p81 = scmp.ne.s32.totalorder %s64, %s80
      %p82 = scmp.eq.s32.totalorder %s23, 0
      %p83 = por %p81, %p82
      %p84 = scmp.eq.s32.totalorder %s24, 0
      %s85 = scalar_select %p84, %s25, 0
      %p86 = scmp.eq.s32.totalorder %s36, 0
      %s87 = scalar_select %p86, %s32, 0
      %s88 = ssub.s32 %s85, %s87
      %p89 = scmp.eq.s32.totalorder %s88, 0
      %s91 = sadd.s32 %s90, 1
      %s92 = scalar_select %p89, %s90, %s91
      %p95 = pneg %p89
      %p96 = scmp.eq.s32.totalorder %s17, 2
      %p97 = por %p95, %p96
      %p98 = scmp.ne.s32.totalorder %s90, %s93
      %p99 = scmp.eq.s32.totalorder %s17, 0
      %p100 = por %p98, %p99
      %p101 = scmp.ne.s32.totalorder %s90, %s93
      %p102 = scmp.eq.s32.totalorder %s22, 2
      %p103 = por %p101, %p102
      %p104 = scmp.ne.s32.totalorder %s93, %s94
      %p105 = scmp.eq.s32.totalorder %s22, 0
      %p106 = por %p104, %p105
      %p107 = scmp.ne.s32.totalorder %s93, %s94
      %p108 = scmp.eq.s32.totalorder %s23, 2
      %p109 = por %p107, %p108
      %p111 = scmp.ne.s32.totalorder %s94, %s110
      %p112 = scmp.eq.s32.totalorder %s23, 0
      %p113 = por %p111, %p112
      %s115 = sadd.s32 %s114, 1
      %p118 = scmp.eq.s32.totalorder %s17, 2
      %p119 = scmp.ne.s32.totalorder %s114, %s116
      %p120 = scmp.eq.s32.totalorder %s17, 0
      %p121 = por %p119, %p120
      %p122 = scmp.ne.s32.totalorder %s114, %s116
      %p123 = scmp.eq.s32.totalorder %s22, 2
      %p124 = por %p122, %p123
      %p125 = scmp.ne.s32.totalorder %s116, %s117
      %p126 = scmp.eq.s32.totalorder %s22, 0
      %p127 = por %p125, %p126
      %p128 = scmp.ne.s32.totalorder %s116, %s117
      %p129 = scmp.eq.s32.totalorder %s23, 2
      %p130 = por %p128, %p129
      %p132 = scmp.ne.s32.totalorder %s117, %s131
      %p133 = scmp.eq.s32.totalorder %s23, 0
      %p134 = por %p132, %p133
      %s136 = sadd.s32 %s135, 1
      %p139 = scmp.eq.s32.totalorder %s17, 2
      %p140 = scmp.ne.s32.totalorder %s135, %s137
      %p141 = scmp.eq.s32.totalorder %s17, 0
      %p142 = por %p140, %p141
      %p143 = scmp.ne.s32.totalorder %s135, %s137
      %p144 = scmp.eq.s32.totalorder %s22, 2
      %p145 = por %p143, %p144
      %p146 = scmp.ne.s32.totalorder %s137, %s138
      %p147 = scmp.eq.s32.totalorder %s22, 0
      %p148 = por %p146, %p147
      %p149 = scmp.ne.s32.totalorder %s137, %s138
      %p150 = scmp.eq.s32.totalorder %s23, 2
      %p151 = por %p149, %p150
      %p153 = scmp.ne.s32.totalorder %s138, %s152
      %p154 = scmp.eq.s32.totalorder %s23, 0
      %p155 = por %p153, %p154
      %s157 = sadd.s32 %s156, 1
      %p160 = scmp.eq.s32.totalorder %s17, 2
      %p161 = scmp.ne.s32.totalorder %s156, %s158
      %p162 = scmp.eq.s32.totalorder %s17, 0
      %p163 = por %p161, %p162
      %p164 = scmp.ne.s32.totalorder %s156, %s158
      %p165 = scmp.eq.s32.totalorder %s22, 2
      %p166 = por %p164, %p165
      %p167 = scmp.ne.s32.totalorder %s158, %s159
      %p168 = scmp.eq.s32.totalorder %s22, 0
      %p169 = por %p167, %p168
      %p170 = scmp.ne.s32.totalorder %s158, %s159
      %p171 = scmp.eq.s32.totalorder %s23, 2
      %p172 = por %p170, %p171
      %p174 = scmp.ne.s32.totalorder %s159, %s173
      %p175 = scmp.eq.s32.totalorder %s23, 0
      %p176 = por %p174, %p175
      %p177 = scmp.le.s32.totalorder 1, %s17
      %p178 = scmp.lt.s32.totalorder %s17, 4
      %p179 = pnand %p177, %p178
      %p180 = pneg %p179
      // Predicated region
      $region9: #{tpu_custom_call.1} parent=5 // pred_check
        _
      $region10: #{tpu_custom_call.1} parent=5 // pred_check_branch
        %182 = sbr.rel (%p179) target = $region12
      $region11: #{tpu_custom_call.1} parent=5 // pred_region
        %s183 = ssub.s32 %s17, 1
        // Predicated region
        $region13: #{tpu_custom_call.1} parent=11 // pred_check
          %p184 = pneg %p50
        $region14: #{tpu_custom_call.1} parent=11 // pred_check_branch
          %186 = sbr.rel (%p184) target = $region16
        $region15: #{tpu_custom_call.1} parent=11 // pred_region
          %s188 = ssub.s32 16, 16
          %189 = vsyncadd [#allocation7], %s188
          %192 = dma.hbm_to_smem %s0, 16, [#allocation4], [#allocation7]
        $region16: #{tpu_custom_call.1} parent=11 // pred_fallthru
          _
        // Predicated region
        $region17: #{tpu_custom_call.1} parent=11 // pred_check
          %p193 = pneg %p76
        $region18: #{tpu_custom_call.1} parent=11 // pred_check_branch
          %195 = sbr.rel (%p193) target = $region20
        $region19: #{tpu_custom_call.1} parent=11 // pred_region
          %s196 = smul.u32 2, %s27
          %s198 = ssub.s32 128, 128
          %199 = vsyncadd [#allocation5], %s198
          %s200 = smul.addr %s196, 64
          %s201 = scalar_lea.hbm %s1, %s200
          %s202 = sshll.u32 [#allocation8], 4
          %s203 = int_to_ptr.vmem [resolvable:$true] %s202
          %208 = dma.hbm_to_vmem [thread:$0]  %s201, 128, %s203, [#allocation5], 64, 64, 4
        $region20: #{tpu_custom_call.1} parent=11 // pred_fallthru
          _
        // Predicated region
        $region21: #{tpu_custom_call.1} parent=11 // pred_check
          %p209 = pneg %p127
        $region22: #{tpu_custom_call.1} parent=11 // pred_check_branch
          %211 = sbr.rel (%p209) target = $region24
        $region23: #{tpu_custom_call.1} parent=11 // pred_region
          %s213 = ssub.s32 128, 128
          %214 = vsyncadd [#allocation10], %s213
          %s215 = sshll.u32 [#allocation11], 4
          %s216 = int_to_ptr.vmem [resolvable:$true] %s215
          %221 = dma.hbm_to_vmem [thread:$0]  %s3, 128, %s216, [#allocation10], 64, 64, 4
        $region24: #{tpu_custom_call.1} parent=11 // pred_fallthru
          _
        // Predicated region
        $region25: #{tpu_custom_call.1} parent=11 // pred_check
          %p222 = pneg %p148
        $region26: #{tpu_custom_call.1} parent=11 // pred_check_branch
          %224 = sbr.rel (%p222) target = $region28
        $region27: #{tpu_custom_call.1} parent=11 // pred_region
          _
        $region28: #{tpu_custom_call.1} parent=11 // pred_fallthru
          _
      $region12: #{tpu_custom_call.1} parent=5 // pred_fallthru
        _
      %p225 = scmp.lt.s32.totalorder %s17, 3
      // Predicated region
      $region29: #{tpu_custom_call.1} parent=5 // pred_check
        %p226 = pneg %p225
      $region30: #{tpu_custom_call.1} parent=5 // pred_check_branch
        %228 = sbr.rel (%p226) target = $region32
      $region31: #{tpu_custom_call.1} parent=5 // pred_region
        // Predicated region
        $region33: #{tpu_custom_call.1} parent=31 // pred_check
          %p229 = pneg %p100
        $region34: #{tpu_custom_call.1} parent=31 // pred_check_branch
          %231 = sbr.rel (%p229) target = $region36
        $region35: #{tpu_custom_call.1} parent=31 // pred_region
          %s232 = sand.u32 %s17, 1
          %s233 = scalar_lea.sflag [#allocation10], %s232
          %s234 = sand.u32 %s90, 1
          %s235 = smul.addr %s234, 16
          %s236 = scalar_lea.vmem [#allocation9], %s235
          %p237 = scmp.eq.s32.totalorder %s24, 0
          %s238 = scalar_select %p237, %s25, 0
          %s239 = smul.u32 2, %s238
          %s241 = ssub.s32 256, 256
          %242 = vsyncadd %s233, %s241
          %s243 = smul.addr %s239, 128
          %s244 = scalar_lea.hbm %s2, %s243
          %s245 = sshll.u32 %s236, 4
          %s246 = int_to_ptr.vmem [resolvable:$true] %s245
          %251 = dma.hbm_to_vmem [thread:$0]  %s244, 256, %s246, %s233, 128, 128, 8
        $region36: #{tpu_custom_call.1} parent=31 // pred_fallthru
          _
      $region32: #{tpu_custom_call.1} parent=5 // pred_fallthru
        _
      %p252 = scmp.le.s32.totalorder 1, %s17
      %p253 = scmp.lt.s32.totalorder %s17, 4
      %p254 = pnand %p252, %p253
      %p255 = pneg %p254
      // Predicated region
      $region37: #{tpu_custom_call.1} parent=5 // pred_check
        _
      $region38: #{tpu_custom_call.1} parent=5 // pred_check_branch
        %257 = sbr.rel (%p254) target = $region40
      $region39: #{tpu_custom_call.1} parent=5 // pred_region
        %s258 = ssub.s32 %s17, 1
        // Predicated region
        $region41: #{tpu_custom_call.1} parent=39 // pred_check
          %p259 = pneg %p50
        $region42: #{tpu_custom_call.1} parent=39 // pred_check_branch
          %261 = sbr.rel (%p259) target = $region44
        $region43: #{tpu_custom_call.1} parent=39 // pred_region
          %262 = dma.done [#allocation7], 16
        $region44: #{tpu_custom_call.1} parent=39 // pred_fallthru
          _
        // Predicated region
        $region45: #{tpu_custom_call.1} parent=39 // pred_check
          %p263 = pneg %p76
        $region46: #{tpu_custom_call.1} parent=39 // pred_check_branch
          %265 = sbr.rel (%p263) target = $region48
        $region47: #{tpu_custom_call.1} parent=39 // pred_region
          %266 = dma.done [#allocation5], 128
        $region48: #{tpu_custom_call.1} parent=39 // pred_fallthru
          _
        %s267 = sand.u32 %s22, 1
        %s268 = scalar_lea.sflag [#allocation10], %s267
        %s269 = sand.u32 %s93, 1
        %s270 = smul.addr %s269, 16
        %s271 = scalar_lea.vmem [#allocation9], %s270
        // Predicated region
        $region49: #{tpu_custom_call.1} parent=39 // pred_check
          %p272 = pneg %p106
        $region50: #{tpu_custom_call.1} parent=39 // pred_check_branch
          %274 = sbr.rel (%p272) target = $region52
        $region51: #{tpu_custom_call.1} parent=39 // pred_region
          %275 = dma.done %s268, 256
        $region52: #{tpu_custom_call.1} parent=39 // pred_fallthru
          _
        // Predicated region
        $region53: #{tpu_custom_call.1} parent=39 // pred_check
          %p276 = pneg %p127
        $region54: #{tpu_custom_call.1} parent=39 // pred_check_branch
          %278 = sbr.rel (%p276) target = $region56
        $region55: #{tpu_custom_call.1} parent=39 // pred_region
          %279 = dma.done [#allocation10], 128
        $region56: #{tpu_custom_call.1} parent=39 // pred_fallthru
          _
        %280 = sfence
        %p281 = pneg %p50
        %p282 = pneg %p47
        %p283 = pneg %p76
        %p284 = pneg %p73
        %s285 = sand.u32 %s22, 1
        %s286 = scalar_lea.sflag [#allocation10], %s285
        %s287 = sand.u32 %s93, 1
        %s288 = smul.addr %s287, 16
        %s289 = scalar_lea.vmem [#allocation9], %s288
        %p290 = pneg %p106
        %p291 = pneg %p103
        %p292 = pneg %p127
        %p293 = pneg %p124
        %p294 = pneg %p148
        %p295 = pneg %p145
        %p296 = pneg %p169
        %p297 = pneg %p166
        %s298 = smul.u32 2, %s27
        %p299 = scmp.eq.s32.totalorder %s26, 0
        %s300 = scalar_select %p299, %s27, 0
        %s301 = smul.u32 2, %s300
        %s303 = sadd.s32 %s26, 1
        %s304 = smul.u32 %s27, 16
        %p305 = scmp.lt.s32.totalorder %s303, 0
        %s306 = ssub.s32 0, %s303
        %s307 = scalar_select %p305, %s306, %s303
        %s308 = sand.u32 %s307, 1
        %s309 = ssub.s32 0, %s308
        %s310 = scalar_select %p305, %s309, %s308
        %s311 = ssub.s32 1, %s310
        %s312 = sld [smem:[#allocation4 + %s303]]
        %s313 = smul.f32 %s312, 0.5
        %p314 = scmp.eq.s32.totalorder %s26, 0
        // Predicated region
        $region57: #{tpu_custom_call.1} parent=39 // pred_check
          %p315 = pneg %p314
        $region58: #{tpu_custom_call.1} parent=39 // pred_check_branch
          %317 = sbr.rel (%p315) target = $region60
        $region59: #{tpu_custom_call.1} parent=39 // pred_region
          %v318 = vld [vmem:[%s271] sm:$0xff]
          %v319 = vld [vmem:[%s271 + $0x8] sm:$0xff]
          %v320 = vld [vmem:[#allocation8] sm:$0xf]
          %v321 = vld [vmem:[#allocation8 + $0x4] sm:$0xf]
          %v322 = vld [vmem:[#allocation11] sm:$0xf]
          %v323 = vld [vmem:[#allocation11 + $0x4] sm:$0xf]
          %v326 = vunpack.c.l.b16 %v320
          %v327 = vunpack.c.l.b16 %v321
          %v328 = vpack.c.b16 %v327, %v326
          %v331 = vunpack.c.l.b16 %v322
          %v332 = vunpack.c.l.b16 %v323
          %v333 = vpack.c.b16 %v332, %v331
          %vm335 = vcmask 130048
          %v337 = vsel %vm335, %v328, 0
          %339 = vmatprep.subr.bf16.mxu0 0
          %340 = vmatpush1.bf16.msra.mxu0 0
          %341 = vmatprep.subr.bf16.mxu0 0
          %342 = vmatpush1.bf16.msra.mxu0 0
          %343 = vmatprep.subr.bf16.mxu0 0
          %344 = vmatpush1.bf16.msra.mxu0 0
          %345 = vmatprep.subr.bf16.mxu0 0
          %346 = vmatpush1.bf16.msra.mxu0 0
          %347 = vmatprep.subr.bf16.mxu0 0
          %348 = vmatpush1.bf16.msra.mxu0 0
          %349 = vmatprep.subr.bf16.mxu0 0
          %350 = vmatpush1.bf16.msra.mxu0 0
          %351 = vmatprep.subr.bf16.mxu0 0
          %352 = vmatpush1.bf16.msra.mxu0 0
          %353 = vmatprep.subr.bf16.mxu0 0
          %354 = vmatpush1.bf16.msra.mxu0 %v333
          %355 = vmatprep.subr.bf16.mxu0 0
          %356 = vmatpush2.bf16.msra.mxu0 0
          %357 = vmatprep.subr.bf16.mxu0 0
          %358 = vmatpush2.bf16.msra.mxu0 0
          %359 = vmatprep.subr.bf16.mxu0 0
          %360 = vmatpush2.bf16.msra.mxu0 0
          %361 = vmatprep.subr.bf16.mxu0 0
          %362 = vmatpush2.bf16.msra.mxu0 0
          %363 = vmatprep.subr.bf16.mxu0 0
          %364 = vmatpush2.bf16.msra.mxu0 0
          %365 = vmatprep.subr.bf16.mxu0 0
          %366 = vmatpush2.bf16.msra.mxu0 0
          %367 = vmatprep.subr.bf16.mxu0 0
          %368 = vmatpush2.bf16.msra.mxu0 0
          %369 = vmatprep.subr.bf16.mxu0 0
          %370 = vmatpush2.bf16.msra.mxu0 0
          %371 = vmatprep.mubr.bf16.mxu0 0
          %372 = vmatmul.mubr.bf16.gmra.mxu0 %v337
          %v373 = vpop.f32.mrf.mxu0
          %v374 = vadd.f32 0.0, %v373
          %v375 = vpop.f32.mrf.mxu0
          %v376 = vpop.f32.mrf.mxu0
          %v377 = vadd.f32 0.0, %v376
          %v378 = vpop.f32.mrf.mxu0
          %379 = vdwg.mxu0
          %s380 = smul.u32 %s311, 16
          %s381 = scalar_lea.vmem [#allocation2], %s380
          %s382 = scalar_lea.vmem %s381, %s304 [#allocation2]
          %383 = vst [vmem:[%s382] sm:$0xff] %v318
          %384 = vst [vmem:[%s382 + $0x8] sm:$0xff] %v319
          %s385 = smul.u32 %s310, 16
          %s386 = scalar_lea.vmem [#allocation2], %s385
          %s387 = scalar_lea.vmem %s386, %s304 [#allocation2]
          %388 = vst [vmem:[%s387] sm:$0xff] %v374
          %389 = vst [vmem:[%s387 + $0x8] sm:$0xff] %v377
          %v390 = vpack.c.bf16 %v377, %v374
          %s391 = smul.u32 %s310, 2
          %s392 = smul.addr %s391, 4
          %s393 = scalar_lea.vmem [#allocation3], %s392
          %v395 = vunpack.c.l.b16 %v390
          %v396 = vunpack.c.h.b16 %v390
          %v397 = vpack.c.b16 %v395, %v395
          %v398 = vpack.c.b16 %v396, %v396
          %s401 = sshra.s32 %s304, 3
          %s402 = sand.u32 %s304, 7
          %s403 = smul.addr %s401, 4
          %s404 = scalar_lea.vmem %s393, %s403 [#allocation3]
          %405 = vst [vmem:[%s404] sm:$0xf] %v397
          %406 = vst [vmem:[%s404 + $0x4] sm:$0xf] %v398
          %s407 = sld [smem:[#allocation4]]
          %v408 = vstv %s407
          %v409 = vmul.f32 %v408, %v318
          %v410 = vmul.f32 %v408, %v319
          %v411 = vld [vmem:[%s4] sm:$0x1]
          %v413 = vlaneseq
          %v414 = vshrl.u32 %v413, 7
          %v415 = vsub.s32 0, %v414
          %v416 = vrot.slane %v411, %v415
          %v418 = vadd.f32 %v409, %v416
          %v419 = vadd.f32 %v410, %v416
          %v420 = vstv %s313
          %v421 = vmul.f32 %v420, %v374
          %v422 = vmul.f32 %v420, %v377
          %v423 = vadd.f32 %v418, %v421
          %v424 = vadd.f32 %v419, %v422
          %s425 = scalar_lea.vmem [#allocation12], %s304
          %426 = vst [vmem:[%s425] sm:$0xff] %v423
          %427 = vst [vmem:[%s425 + $0x8] sm:$0xff] %v424
        $region60: #{tpu_custom_call.1} parent=39 // pred_fallthru
          _
        %p428 = scmp.ge.s32.totalorder %s26, 1
        // Predicated region
        $region61: #{tpu_custom_call.1} parent=39 // pred_check
          %p429 = pneg %p428
        $region62: #{tpu_custom_call.1} parent=39 // pred_check_branch
          %431 = sbr.rel (%p429) target = $region64
        $region63: #{tpu_custom_call.1} parent=39 // pred_region
          %v432 = vld [vmem:[#allocation8] sm:$0xf]
          %v433 = vld [vmem:[#allocation8 + $0x4] sm:$0xf]
          %s434 = smul.u32 %s311, 2
          %s435 = smul.addr %s434, 4
          %s436 = scalar_lea.vmem [#allocation3], %s435
          %v437 = vld [vmem:[%s436] sm:$0xf]
          %v438 = vld [vmem:[%s436 + $0x4] sm:$0xf]
          %v441 = vunpack.c.l.b16 %v432
          %v442 = vunpack.c.l.b16 %v433
          %v443 = vpack.c.b16 %v442, %v441
          %v446 = vunpack.c.l.b16 %v437
          %v447 = vunpack.c.l.b16 %v438
          %v448 = vpack.c.b16 %v447, %v446
          %vm450 = vcmask 130048
          %v452 = vsel %vm450, %v443, 0
          %454 = vmatprep.subr.bf16.mxu0 0
          %455 = vmatpush1.bf16.msra.mxu0 0
          %456 = vmatprep.subr.bf16.mxu0 0
          %457 = vmatpush1.bf16.msra.mxu0 0
          %458 = vmatprep.subr.bf16.mxu0 0
          %459 = vmatpush1.bf16.msra.mxu0 0
          %460 = vmatprep.subr.bf16.mxu0 0
          %461 = vmatpush1.bf16.msra.mxu0 0
          %462 = vmatprep.subr.bf16.mxu0 0
          %463 = vmatpush1.bf16.msra.mxu0 0
          %464 = vmatprep.subr.bf16.mxu0 0
          %465 = vmatpush1.bf16.msra.mxu0 0
          %466 = vmatprep.subr.bf16.mxu0 0
          %467 = vmatpush1.bf16.msra.mxu0 0
          %468 = vmatprep.subr.bf16.mxu0 0
          %469 = vmatpush1.bf16.msra.mxu0 %v448
          %470 = vmatprep.subr.bf16.mxu0 0
          %471 = vmatpush2.bf16.msra.mxu0 0
          %472 = vmatprep.subr.bf16.mxu0 0
          %473 = vmatpush2.bf16.msra.mxu0 0
          %474 = vmatprep.subr.bf16.mxu0 0
          %475 = vmatpush2.bf16.msra.mxu0 0
          %476 = vmatprep.subr.bf16.mxu0 0
          %477 = vmatpush2.bf16.msra.mxu0 0
          %478 = vmatprep.subr.bf16.mxu0 0
          %479 = vmatpush2.bf16.msra.mxu0 0
          %480 = vmatprep.subr.bf16.mxu0 0
          %481 = vmatpush2.bf16.msra.mxu0 0
          %482 = vmatprep.subr.bf16.mxu0 0
          %483 = vmatpush2.bf16.msra.mxu0 0
          %484 = vmatprep.subr.bf16.mxu0 0
          %485 = vmatpush2.bf16.msra.mxu0 0
          %486 = vmatprep.mubr.bf16.mxu0 0
          %487 = vmatmul.mubr.bf16.gmra.mxu0 %v452
          %v488 = vpop.f32.mrf.mxu0
          %v489 = vadd.f32 0.0, %v488
          %v490 = vpop.f32.mrf.mxu0
          %v491 = vpop.f32.mrf.mxu0
          %v492 = vadd.f32 0.0, %v491
          %v493 = vpop.f32.mrf.mxu0
          %494 = vdwg.mxu0
          %v495 = vmul.f32 %v489, 2.0
          %v496 = vmul.f32 %v492, 2.0
          %s497 = smul.u32 %s310, 16
          %s498 = scalar_lea.vmem [#allocation2], %s497
          %s499 = scalar_lea.vmem %s498, %s304 [#allocation2]
          %v500 = vld [vmem:[%s499] sm:$0xff]
          %v501 = vld [vmem:[%s499 + $0x8] sm:$0xff]
          %v502 = vsub.f32 %v495, %v500
          %v503 = vsub.f32 %v496, %v501
          %504 = vst [vmem:[%s499] sm:$0xff] %v502
          %505 = vst [vmem:[%s499 + $0x8] sm:$0xff] %v503
          %v506 = vpack.c.bf16 %v503, %v502
          %s507 = smul.u32 %s310, 2
          %s508 = smul.addr %s507, 4
          %s509 = scalar_lea.vmem [#allocation3], %s508
          %v511 = vunpack.c.l.b16 %v506
          %v512 = vunpack.c.h.b16 %v506
          %v513 = vpack.c.b16 %v511, %v511
          %v514 = vpack.c.b16 %v512, %v512
          %s517 = sshra.s32 %s304, 3
          %s518 = sand.u32 %s304, 7
          %s519 = smul.addr %s517, 4
          %s520 = scalar_lea.vmem %s509, %s519 [#allocation3]
          %521 = vst [vmem:[%s520] sm:$0xf] %v513
          %522 = vst [vmem:[%s520 + $0x4] sm:$0xf] %v514
          %s523 = scalar_lea.vmem [#allocation12], %s304
          %v524 = vld [vmem:[%s523] sm:$0xff]
          %v525 = vld [vmem:[%s523 + $0x8] sm:$0xff]
          %v526 = vstv %s313
          %v527 = vmul.f32 %v526, %v502
          %v528 = vmul.f32 %v526, %v503
          %v529 = vadd.f32 %v524, %v527
          %v530 = vadd.f32 %v525, %v528
          %531 = vst [vmem:[%s523] sm:$0xff] %v529
          %532 = vst [vmem:[%s523 + $0x8] sm:$0xff] %v530
        $region64: #{tpu_custom_call.1} parent=39 // pred_fallthru
          _
        %p533 = scmp.eq.s32.totalorder %s26, 2
        // Predicated region
        $region65: #{tpu_custom_call.1} parent=39 // pred_check
          %p534 = pneg %p533
        $region66: #{tpu_custom_call.1} parent=39 // pred_check_branch
          %536 = sbr.rel (%p534) target = $region68
        $region67: #{tpu_custom_call.1} parent=39 // pred_region
          %s537 = scalar_lea.vmem [#allocation12], %s304
          %v538 = vld [vmem:[%s537] sm:$0xff]
          %v539 = vld [vmem:[%s537 + $0x8] sm:$0xff]
          %vm540 = vcmp.gt.f32.partialorder %v538, 0.0
          %vm541 = vcmp.gt.f32.partialorder %v539, 0.0
          %v542 = vmul.f32 %v538, 0.01
          %v543 = vmul.f32 %v539, 0.01
          %v544 = vsel %vm540, %v538, %v542
          %v545 = vsel %vm541, %v539, %v543
          %546 = vst [vmem:[%s537] sm:$0xff] %v544
          %547 = vst [vmem:[%s537 + $0x8] sm:$0xff] %v545
        $region68: #{tpu_custom_call.1} parent=39 // pred_fallthru
          _
        // Predicated region
        $region69: #{tpu_custom_call.1} parent=39 // pred_check
          %p548 = pneg %p166
        $region70: #{tpu_custom_call.1} parent=39 // pred_check_branch
          %550 = sbr.rel (%p548) target = $region72
        $region71: #{tpu_custom_call.1} parent=39 // pred_region
          %s552 = ssub.s32 256, 256
          %553 = vsyncadd [#allocation6], %s552
          %s554 = sshll.u32 [#allocation12], 4
          %s555 = int_to_ptr.vmem [resolvable:$true] %s554
          %560 = dma.vmem_to_hbm [thread:$0]  %s555, 256, %s5, [#allocation6], 128, 128, 8
        $region72: #{tpu_custom_call.1} parent=39 // pred_fallthru
          _
        // Predicated region
        $region73: #{tpu_custom_call.1} parent=39 // pred_check
          %p561 = pneg %p166
        $region74: #{tpu_custom_call.1} parent=39 // pred_check_branch
          %563 = sbr.rel (%p561) target = $region76
        $region75: #{tpu_custom_call.1} parent=39 // pred_region
          %564 = dma.done [#allocation6], 256
        $region76: #{tpu_custom_call.1} parent=39 // pred_fallthru
          _
      $region40: #{tpu_custom_call.1} parent=5 // pred_fallthru
        _
      %p565 = scmp.le.s32.totalorder 2, %s17
      // Predicated region
      $region77: #{tpu_custom_call.1} parent=5 // pred_check
        %p566 = pneg %p565
      $region78: #{tpu_custom_call.1} parent=5 // pred_check_branch
        %568 = sbr.rel (%p566) target = $region80
      $region79: #{tpu_custom_call.1} parent=5 // pred_region
        %s569 = ssub.s32 %s17, 2
      $region80: #{tpu_custom_call.1} parent=5 // pred_fallthru
        _
    $region6: #{tpu_custom_call.1} parent=1 // loop_footer
      %s21 = sadd.s32 1, %s17
    $region7: #{tpu_custom_call.1} parent=1 // loop_footer_branch
      %16 = sbr.rel target = $region3
    $region8: #{tpu_custom_call.1} parent=1 // loop_exit
      _
    %570 = vsyncpa [#allocation5], 1
    %s571 = scalar_lea.sflag [#allocation5], 1
    %572 = vsyncpa %s571, 1
    %573 = vsyncpa [#allocation10], 1
    %s574 = scalar_lea.sflag [#allocation10], 1
    %575 = vsyncpa %s574, 1
    %576 = vsyncpa [#allocation6], 1
    %s577 = scalar_lea.sflag [#allocation6], 1
    %578 = vsyncpa %s577, 1
    %579 = vsyncpa [#allocation7], 1
    %s580 = scalar_lea.sflag [#allocation7], 1
    %581 = vsyncpa %s580, 1

</llo_original>
